<compile_context>
chip_gen: v7x
topology: tpu7x:2x2x1
jax: 0.10.0
libtpu: 0.0.40
codegen_flags: <defaults>
</compile_context>

<pallas_src>
import functools

import jax
import jax.numpy as jnp
from jax.experimental import pallas as pl
from jax.experimental.pallas import tpu as pltpu

LANE = 128
DEFAULT_BLOCK_ROWS = 2048  # (2048, 128) f32 = 1 MiB per input block.


def _iou_sums_kernel(x_ref, t_ref, inter_ref, total_ref, *, n_valid):
    """Accumulate per-lane partial sums of sigmoid(x)*t and sigmoid(x)+t."""
    i = pl.program_id(0)
    bm, lane = x_ref.shape

    @pl.when(i == 0)
    def _():
        inter_ref[...] = jnp.zeros_like(inter_ref)
        total_ref[...] = jnp.zeros_like(total_ref)

    # Mask the tail using the *logical* flat element index, so any padding
    # values (or garbage in the out-of-bounds part of a partial final block)
    # contribute exactly zero.
    row = jax.lax.broadcasted_iota(jnp.int32, (bm, lane), 0)
    col = jax.lax.broadcasted_iota(jnp.int32, (bm, lane), 1)
    gidx = (i * bm + row) * lane + col
    valid = gidx < n_valid

    x = x_ref[...].astype(jnp.float32)
    t = t_ref[...].astype(jnp.float32)
    s = jnp.where(valid, jax.nn.sigmoid(x), 0.0)
    t = jnp.where(valid, t, 0.0)

    # Per-lane partials only; full cross-lane reduce happens once, outside.
    inter_ref[...] += jnp.sum(s * t, axis=0, keepdims=True)
    total_ref[...] += jnp.sum(s + t, axis=0, keepdims=True)


def iou_loss(inputs, targets, smooth=1.0, block_rows=DEFAULT_BLOCK_ROWS):
    """Pallas TPU implementation of IOULoss.forward (returns a scalar)."""
    x = inputs.reshape(-1)
    t = targets.reshape(-1)
    n = x.shape[0]

    # Pad only up to the next multiple of 128 lanes, and only when required;
    # the in-kernel mask makes the pad values irrelevant.
    rows = pl.cdiv(n, LANE)
    padded = rows * LANE
    if padded != n:
        x = jnp.pad(x, (0, padded - n))
        t = jnp.pad(t, (0, padded - n))

    x2 = x.reshape(rows, LANE)
    t2 = t.reshape(rows, LANE)

    # Block rows: full extent for small arrays, otherwise a large multiple of 8.
    block_rows = max(8, (int(block_rows) // 8) * 8)
    bm = rows if rows <= block_rows else block_rows
    grid = (pl.cdiv(rows, bm),)

    kernel = functools.partial(_iou_sums_kernel, n_valid=int(n))

    inter_part, total_part = pl.pallas_call(
        kernel,
        out_shape=(
            jax.ShapeDtypeStruct((1, LANE), jnp.float32),
            jax.ShapeDtypeStruct((1, LANE), jnp.float32),
        ),
        grid_spec=pltpu.PrefetchScalarGridSpec(
            num_scalar_prefetch=0,
            grid=grid,
            in_specs=[
                pl.BlockSpec((bm, LANE), lambda i: (i, 0)),
                pl.BlockSpec((bm, LANE), lambda i: (i, 0)),
            ],
            out_specs=[
                pl.BlockSpec((1, LANE), lambda i: (0, 0)),
                pl.BlockSpec((1, LANE), lambda i: (0, 0)),
            ],
        ),
        compiler_params=pltpu.CompilerParams(
            dimension_semantics=("arbitrary",),
        ),
    )(x2, t2)

    # Tiny epilogue in plain JAX: one cross-lane reduce per partial + scalars.
    inter = jnp.sum(inter_part)
    total = jnp.sum(total_part)
    union = total - inter
    iou = (inter + smooth) / (union + smooth)
    return 1.0 - iou


def _iou_loss_ref(inputs, targets, smooth=1.0):
    x = jax.nn.sigmoid(inputs.astype(jnp.float32)).reshape(-1)
    t = targets.astype(jnp.float32).reshape(-1)
    inter = jnp.sum(x * t)
    total = jnp.sum(x + t)
    union = total - inter
    return 1.0 - (inter + smooth) / (union + smooth)


if __name__ == "__main__":
    key = jax.random.PRNGKey(0)
    k1, k2, k3, k4 = jax.random.split(key, 4)

    # NCHW segmentation-style inputs: logits + binary masks.
    shape = (2, 4, 16, 16)
    logits = jax.random.normal(k1, shape, dtype=jnp.float32)
    masks = (jax.random.uniform(k2, shape) > 0.5).astype(jnp.float32)

    ref = _iou_loss_ref(logits, masks, smooth=1.0)

    # Single-block path (default large block clamps to the full extent).
    loss = jax.block_until_ready(iou_loss(logits, masks, smooth=1.0))
    assert jnp.allclose(loss, ref, atol=1e-5, rtol=1e-5), (loss, ref)

    # Multi-step grid path (exercises cross-step accumulation / init).
    loss2 = jax.block_until_ready(iou_loss(logits, masks, smooth=1.0, block_rows=8))
    assert jnp.allclose(loss2, ref, atol=1e-5, rtol=1e-5), (loss2, ref)

    # Ragged size (not a multiple of 128): exercises in-kernel tail masking,
    # both with a full-extent block and with a partial final block.
    shape3 = (2, 3, 15, 17)
    logits3 = jax.random.normal(k3, shape3, dtype=jnp.float32)
    masks3 = (jax.random.uniform(k4, shape3) > 0.5).astype(jnp.float32)
    ref3 = _iou_loss_ref(logits3, masks3, smooth=1.0)

    loss3 = jax.block_until_ready(iou_loss(logits3, masks3, smooth=1.0))
    assert jnp.allclose(loss3, ref3, atol=1e-5, rtol=1e-5), (loss3, ref3)

    loss4 = jax.block_until_ready(iou_loss(logits3, masks3, smooth=1.0, block_rows=8))
    assert jnp.allclose(loss4, ref3, atol=1e-5, rtol=1e-5), (loss4, ref3)

    print("KERNEL_OK")
</pallas_src>

<mosaic_0001>
module attributes {stable_mosaic.version = 11 : i64} {
  func.func @_iou_sums_kernel(%arg0: i32, %arg1: memref<16x128xf32, #tpu.memory_space<vmem>>, %arg2: memref<16x128xf32, #tpu.memory_space<vmem>>, %arg3: memref<1x128xf32, #tpu.memory_space<vmem>>, %arg4: memref<1x128xf32, #tpu.memory_space<vmem>>) attributes {dimension_semantics = [#tpu.dimension_semantics<arbitrary>], iteration_bounds = array<i64: 1>, scalar_prefetch = 0 : i64, scratch_operands = 0 : i64, tpu.core_type = #tpu.core_type<tc>, window_params = [{transform_indices = @transform_0, window_bounds = array<i64: 16, 128>}, {transform_indices = @transform_1, window_bounds = array<i64: 16, 128>}, {pipeline_mode = #tpu.pipeline_mode<synchronous>, transform_indices = @transform_2, window_bounds = array<i64: 1, 128>}, {pipeline_mode = #tpu.pipeline_mode<synchronous>, transform_indices = @transform_3, window_bounds = array<i64: 1, 128>}]} {
    %c0_i32 = arith.constant 0 : i32
    %0 = arith.cmpi eq, %arg0, %c0_i32 : i32
    %1 = arith.extui %0 : i1 to i32
    %c0_i32_0 = arith.constant 0 : i32
    %2 = arith.cmpi ne, %1, %c0_i32_0 : i32
    scf.if %2 {
      %cst_16 = arith.constant 0.000000e+00 : f32
      %36 = vector.broadcast %cst_16 : f32 to vector<1x128xf32>
      %c0_17 = arith.constant 0 : index
      %c0_18 = arith.constant 0 : index
      %37 = vector.load %arg3[%c0_17, %c0_18] : memref<1x128xf32, #tpu.memory_space<vmem>>, vector<1x128xf32>
      tpu.vector_store %arg3[%c0_17, %c0_18], %36 {strides = array<i32>} : memref<1x128xf32, #tpu.memory_space<vmem>>, vector<1x128xf32>,
      %cst_19 = arith.constant 0.000000e+00 : f32
      %38 = vector.broadcast %cst_19 : f32 to vector<1x128xf32>
      %c0_20 = arith.constant 0 : index
      %c0_21 = arith.constant 0 : index
      %39 = vector.load %arg4[%c0_20, %c0_21] : memref<1x128xf32, #tpu.memory_space<vmem>>, vector<1x128xf32>
      tpu.vector_store %arg4[%c0_20, %c0_21], %38 {strides = array<i32>} : memref<1x128xf32, #tpu.memory_space<vmem>>, vector<1x128xf32>,
    } else {
    }
    %3 = tpu.iota {dimensions = array<i32: 0>} : vector<16x128xi32>
    %4 = tpu.iota {dimensions = array<i32: 1>} : vector<16x128xi32>
    %c16_i32 = arith.constant 16 : i32
    %5 = arith.muli %arg0, %c16_i32 : i32
    %6 = vector.broadcast %5 : i32 to vector<16x128xi32>
    %7 = arith.addi %6, %3 : vector<16x128xi32>
    %c128_i32 = arith.constant 128 : i32
    %8 = vector.broadcast %c128_i32 : i32 to vector<16x128xi32>
    %9 = arith.muli %7, %8 : vector<16x128xi32>
    %10 = arith.addi %9, %4 : vector<16x128xi32>
    %c2048_i32 = arith.constant 2048 : i32
    %11 = vector.broadcast %c2048_i32 : i32 to vector<16x128xi32>
    %12 = arith.cmpi slt, %10, %11 : vector<16x128xi32>
    %c0 = arith.constant 0 : index
    %c0_1 = arith.constant 0 : index
    %13 = vector.load %arg1[%c0, %c0_1] : memref<16x128xf32, #tpu.memory_space<vmem>>, vector<16x128xf32>
    %c0_2 = arith.constant 0 : index
    %c0_3 = arith.constant 0 : index
    %14 = vector.load %arg2[%c0_2, %c0_3] : memref<16x128xf32, #tpu.memory_space<vmem>>, vector<16x128xf32>
    %15 = arith.negf %13 : vector<16x128xf32>
    %16 = math.exp %15 : vector<16x128xf32>
    %cst = arith.constant 1.000000e+00 : f32
    %17 = vector.broadcast %cst : f32 to vector<16x128xf32>
    %18 = arith.addf %17, %16 : vector<16x128xf32>
    %19 = arith.divf %17, %18 : vector<16x128xf32>
    %cst_4 = arith.constant 0.000000e+00 : f32
    %20 = vector.broadcast %cst_4 : f32 to vector<16x128xf32>
    %21 = arith.select %12, %19, %20 : vector<16x128xi1>, vector<16x128xf32>
    %cst_5 = arith.constant 0.000000e+00 : f32
    %22 = vector.broadcast %cst_5 : f32 to vector<16x128xf32>
    %23 = arith.select %12, %14, %22 : vector<16x128xi1>, vector<16x128xf32>
    %c0_6 = arith.constant 0 : index
    %c0_7 = arith.constant 0 : index
    %24 = vector.load %arg3[%c0_6, %c0_7] : memref<1x128xf32, #tpu.memory_space<vmem>>, vector<1x128xf32>
    %25 = arith.mulf %21, %23 : vector<16x128xf32>
    %cst_8 = arith.constant dense<0.000000e+00> : vector<128xf32>
    %26 = vector.multi_reduction <add>, %25, %cst_8 [0] : vector<16x128xf32> to vector<128xf32>
    %27 = vector.shape_cast %26 : vector<128xf32> to vector<1x128xf32>
    %28 = arith.addf %24, %27 : vector<1x128xf32>
    %c0_9 = arith.constant 0 : index
    %c0_10 = arith.constant 0 : index
    %29 = vector.load %arg3[%c0_9, %c0_10] : memref<1x128xf32, #tpu.memory_space<vmem>>, vector<1x128xf32>
    tpu.vector_store %arg3[%c0_9, %c0_10], %28 {strides = array<i32>} : memref<1x128xf32, #tpu.memory_space<vmem>>, vector<1x128xf32>,
    %c0_11 = arith.constant 0 : index
    %c0_12 = arith.constant 0 : index
    %30 = vector.load %arg4[%c0_11, %c0_12] : memref<1x128xf32, #tpu.memory_space<vmem>>, vector<1x128xf32>
    %31 = arith.addf %21, %23 : vector<16x128xf32>
    %cst_13 = arith.constant dense<0.000000e+00> : vector<128xf32>
    %32 = vector.multi_reduction <add>, %31, %cst_13 [0] : vector<16x128xf32> to vector<128xf32>
    %33 = vector.shape_cast %32 : vector<128xf32> to vector<1x128xf32>
    %34 = arith.addf %30, %33 : vector<1x128xf32>
    %c0_14 = arith.constant 0 : index
    %c0_15 = arith.constant 0 : index
    %35 = vector.load %arg4[%c0_14, %c0_15] : memref<1x128xf32, #tpu.memory_space<vmem>>, vector<1x128xf32>
    tpu.vector_store %arg4[%c0_14, %c0_15], %34 {strides = array<i32>} : memref<1x128xf32, #tpu.memory_space<vmem>>, vector<1x128xf32>,
    return
  }
  func.func @transform_0(%arg0: i32) -> (i32, i32) {
    %c0_i32 = arith.constant 0 : i32
    %c0_i32_0 = arith.constant 0 : i32
    return %arg0, %c0_i32 : i32, i32
  }
  func.func @transform_1(%arg0: i32) -> (i32, i32) {
    %c0_i32 = arith.constant 0 : i32
    %c0_i32_0 = arith.constant 0 : i32
    return %arg0, %c0_i32 : i32, i32
  }
  func.func @transform_2(%arg0: i32) -> (i32, i32) {
    %c0_i32 = arith.constant 0 : i32
    %c0_i32_0 = arith.constant 0 : i32
    %c0_i32_1 = arith.constant 0 : i32
    return %c0_i32, %c0_i32_0 : i32, i32
  }
  func.func @transform_3(%arg0: i32) -> (i32, i32) {
    %c0_i32 = arith.constant 0 : i32
    %c0_i32_0 = arith.constant 0 : i32
    %c0_i32_1 = arith.constant 0 : i32
    return %c0_i32, %c0_i32_0 : i32, i32
  }
}

</mosaic_0001>

<llo_original>
// kernel: tpu_custom_call.1
$region0: #{tpu_custom_call.1}
  #allocation0 [shape = 'u32[]', space=smem, size = 0x4, offset = 0x4, fixed_abs, tag = 'smem constant byte address 0x4 - core index']
  #allocation1 [shape = 'u32[144,128]{1,0:T(1,128)}', space=vmem, size = 0x12000, scoped, tag = 'internal scratch']
  %s0 = inlined_call_operand.hbm [shape: f32[16,128], index: 0, kind: input, shape index: {}]
  %s1 = inlined_call_operand.hbm [shape: f32[16,128], index: 1, kind: input, shape index: {}]
  %s2 = inlined_call_operand.hbm [shape: f32[1,128], index: 2, kind: output, shape index: {0}]
  %s3 = inlined_call_operand.hbm [shape: f32[1,128], index: 3, kind: output, shape index: {1}]
  %4 = xla_tuple %s2, %s3
  %s5 = sld [smem:[#allocation0]]
  $region38: #{tpu_custom_call.1} parent=0
    _
  %s7 = ssub.s32 1, %s5
  %s8 = scalar_select 0, %s7, %s5
  $region1: #{tpu_custom_call.1} parent=0
    #allocation2 [shape = 'u8[8192]{0}', space=vmem, size = 0x2000, scoped, tag = 'input window, operand 0, single buffered']
    #allocation3 [shape = 's32[1]{0}', space=sflag, size = 0x4, scoped, tag = 'scoped memory for tpu_custom_call.1']
    #allocation4 [shape = 's32[1]{0}', space=sflag, size = 0x4, scoped, tag = 'scoped memory for tpu_custom_call.1']
    #allocation5 [shape = 'u8[8192]{0}', space=vmem, size = 0x2000, scoped, tag = 'input window, operand 1, single buffered']
    #allocation6 [shape = 's32[1]{0}', space=sflag, size = 0x4, scoped, tag = 'scoped memory for tpu_custom_call.1']
    #allocation7 [shape = 'u8[512]{0}', space=vmem, size = 0x400, scoped, tag = 'output window, operand 0, single buffered']
    #allocation8 [shape = 'u8[512]{0}', space=vmem, size = 0x400, scoped, tag = 'output window, operand 1, single buffered']
    #allocation9 [shape = 's32[1]{0}', space=sflag, size = 0x4, scoped, tag = 'scoped memory for tpu_custom_call.1']
    %9 = vsyncpa [#allocation3], 0
    %10 = vsyncpa [#allocation6], 0
    %11 = vsyncpa [#allocation4], 0
    %12 = vsyncpa [#allocation9], 0
    // Predicated region
    $region2: #{tpu_custom_call.1} parent=1 // pred_check
      _
    $region3: #{tpu_custom_call.1} parent=1 // pred_check_branch
      %14 = sbr.rel (0) target = $region5
    $region4: #{tpu_custom_call.1} parent=1 // pred_region
      %s16 = ssub.s32 256, 256
      %17 = vsyncadd [#allocation3], %s16
      %s18 = sshll.u32 [#allocation2], 4
      %s19 = int_to_ptr.vmem [resolvable:$true] %s18
      %24 = dma.hbm_to_vmem [thread:$0]  %s0, 256, %s19, [#allocation3], 128, 128, 8
    $region5: #{tpu_custom_call.1} parent=1 // pred_fallthru
      _
    // Predicated region
    $region6: #{tpu_custom_call.1} parent=1 // pred_check
      _
    $region7: #{tpu_custom_call.1} parent=1 // pred_check_branch
      %26 = sbr.rel (0) target = $region9
    $region8: #{tpu_custom_call.1} parent=1 // pred_region
      %s28 = ssub.s32 256, 256
      %29 = vsyncadd [#allocation6], %s28
      %s30 = sshll.u32 [#allocation5], 4
      %s31 = int_to_ptr.vmem [resolvable:$true] %s30
      %36 = dma.hbm_to_vmem [thread:$0]  %s1, 256, %s31, [#allocation6], 128, 128, 8
    $region9: #{tpu_custom_call.1} parent=1 // pred_fallthru
      _
    // Predicated region
    $region10: #{tpu_custom_call.1} parent=1 // pred_check
      _
    $region11: #{tpu_custom_call.1} parent=1 // pred_check_branch
      %38 = sbr.rel (0) target = $region13
    $region12: #{tpu_custom_call.1} parent=1 // pred_region
      %39 = dma.done [#allocation3], 256
    $region13: #{tpu_custom_call.1} parent=1 // pred_fallthru
      _
    // Predicated region
    $region14: #{tpu_custom_call.1} parent=1 // pred_check
      _
    $region15: #{tpu_custom_call.1} parent=1 // pred_check_branch
      %41 = sbr.rel (0) target = $region17
    $region16: #{tpu_custom_call.1} parent=1 // pred_region
      %42 = dma.done [#allocation6], 256
    $region17: #{tpu_custom_call.1} parent=1 // pred_fallthru
      _
    %p43 = scmp.eq.s32.totalorder 0, 0
    // Predicated region
    $region18: #{tpu_custom_call.1} parent=1 // pred_check
      %p44 = pneg %p43
    $region19: #{tpu_custom_call.1} parent=1 // pred_check_branch
      %46 = sbr.rel (%p44) target = $region21
    $region20: #{tpu_custom_call.1} parent=1 // pred_region
      %47 = vst [vmem:[#allocation7] sm:$0x1] 0.0
      %48 = vst [vmem:[#allocation8] sm:$0x1] 0.0
    $region21: #{tpu_custom_call.1} parent=1 // pred_fallthru
      _
    %v49 = vlaneseq
    %v50 = vshrl.u32 %v49, 7
    %v51 = vadd.s32 %v50, 8
    %v52 = vlaneseq
    %v53 = vand.u32 %v52, 127
    %s54 = smul.u32 0, 16
    %v55 = vstv %s54
    %v56 = vadd.s32 %v55, %v50
    %v57 = vadd.s32 %v55, %v51
    %v58 = vmul.u32 %v56, 128
    %v59 = vmul.u32 %v57, 128
    %v60 = vadd.s32 %v58, %v53
    %v61 = vadd.s32 %v59, %v53
    %vm62 = vcmp.lt.s32.totalorder %v60, 2048
    %vm63 = vcmp.lt.s32.totalorder %v61, 2048
    %v64 = vld [vmem:[#allocation2] sm:$0xff]
    %v65 = vld [vmem:[#allocation2 + $0x8] sm:$0xff]
    %v66 = vld [vmem:[#allocation5] sm:$0xff]
    %v67 = vld [vmem:[#allocation5 + $0x8] sm:$0xff]
    %v68 = vxor.u32 %v64, 2147483648
    %v69 = vxor.u32 %v65, 2147483648
    %v70 = vmul.f32 %v68, 1.442695
    %v71 = vpow.pop %v70
    %v72 = vmul.f32 %v69, 1.442695
    %v73 = vpow.pop %v72
    %v74 = vadd.f32 %v71, 1.0
    %v75 = vadd.f32 %v73, 1.0
    %v76 = vrcp.pop %v74
    %v77 = vmul.f32 1.0, %v76
    %v78 = vrcp.pop %v75
    %v79 = vmul.f32 1.0, %v78
    %v80 = vsel %vm62, %v77, 0.0
    %v81 = vsel %vm63, %v79, 0.0
    %v82 = vsel %vm62, %v66, 0.0
    %v83 = vsel %vm63, %v67, 0.0
    %v84 = vld [vmem:[#allocation7] sm:$0x1]
    %v85 = vmul.f32 %v80, %v82
    %v86 = vmul.f32 %v81, %v83
    %v87 = vadd.f32 %v85, %v86
    %v88 = vrot.slane %v87, 4
    %v89 = vadd.f32 %v87, %v88
    %v90 = vrot.slane %v89, 2
    %v91 = vadd.f32 %v89, %v90
    %v92 = vrot.slane %v91, 1
    %v93 = vadd.f32 %v91, %v92
    %v94 = vadd.f32 %v84, %v93
    %95 = vst [vmem:[#allocation7] sm:$0x1] %v94
    %v96 = vld [vmem:[#allocation8] sm:$0x1]
    %v97 = vadd.f32 %v80, %v82
    %v98 = vadd.f32 %v81, %v83
    %v99 = vadd.f32 %v97, %v98
    %v100 = vrot.slane %v99, 4
    %v101 = vadd.f32 %v99, %v100
    %v102 = vrot.slane %v101, 2
    %v103 = vadd.f32 %v101, %v102
    %v104 = vrot.slane %v103, 1
    %v105 = vadd.f32 %v103, %v104
    %v106 = vadd.f32 %v96, %v105
    %107 = vst [vmem:[#allocation8] sm:$0x1] %v106
    // Predicated region
    $region22: #{tpu_custom_call.1} parent=1 // pred_check
      _
    $region23: #{tpu_custom_call.1} parent=1 // pred_check_branch
      %109 = sbr.rel (0) target = $region25
    $region24: #{tpu_custom_call.1} parent=1 // pred_region
      %s111 = ssub.s32 16, 16
      %112 = vsyncadd [#allocation4], %s111
      %s114 = sshll.u32 [#allocation7], 4
      %s115 = int_to_ptr.vmem [resolvable:$true] %s114
      %117 = dma.vmem_to_hbm [thread:$0]  %s115, 16, %s2, [#allocation4]
    $region25: #{tpu_custom_call.1} parent=1 // pred_fallthru
      _
    // Predicated region
    $region26: #{tpu_custom_call.1} parent=1 // pred_check
      _
    $region27: #{tpu_custom_call.1} parent=1 // pred_check_branch
      %119 = sbr.rel (0) target = $region29
    $region28: #{tpu_custom_call.1} parent=1 // pred_region
      %s121 = ssub.s32 16, 16
      %122 = vsyncadd [#allocation9], %s121
      %s124 = sshll.u32 [#allocation8], 4
      %s125 = int_to_ptr.vmem [resolvable:$true] %s124
      %127 = dma.vmem_to_hbm [thread:$0]  %s125, 16, %s3, [#allocation9]
    $region29: #{tpu_custom_call.1} parent=1 // pred_fallthru
      _
    // Predicated region
    $region30: #{tpu_custom_call.1} parent=1 // pred_check
      _
    $region31: #{tpu_custom_call.1} parent=1 // pred_check_branch
      %129 = sbr.rel (0) target = $region33
    $region32: #{tpu_custom_call.1} parent=1 // pred_region
      %130 = dma.done [#allocation4], 16
    $region33: #{tpu_custom_call.1} parent=1 // pred_fallthru
      _
    // Predicated region
    $region34: #{tpu_custom_call.1} parent=1 // pred_check
      _
    $region35: #{tpu_custom_call.1} parent=1 // pred_check_branch
      %132 = sbr.rel (0) target = $region37
    $region36: #{tpu_custom_call.1} parent=1 // pred_region
      %133 = dma.done [#allocation9], 16
    $region37: #{tpu_custom_call.1} parent=1 // pred_fallthru
      _
    %134 = vsyncpa [#allocation3], 1
    %135 = vsyncpa [#allocation6], 1
    %136 = vsyncpa [#allocation4], 1
    %137 = vsyncpa [#allocation9], 1

</llo_original>
